<compile_context>
chip_gen: v5e
topology: v5e:2x2
jax: 0.10.0
libtpu: 0.0.40
codegen_flags: <defaults>
</compile_context>

<pallas_src>
import math

import jax
import jax.numpy as jnp
import numpy as np
from jax.experimental import pallas as pl
from jax.experimental.pallas import tpu as pltpu

EPS = 1e-8


def _make_kernel(prior_log_odds):
    prior = float(prior_log_odds)

    def kernel(x_ref, p_ref, lbf_ref, lbf_is_ref):
        # x_ref:      [3, TB, TT]  channel-major probabilities (ceph, transv, breech)
        # p_ref:      [TB, 3]      posterior accumulator (sum over T) -> final prob
        # lbf_ref:    [TB, 3, TT]  clamped log10 Bayes factors
        # lbf_is_ref: [TB, 3, TT]  thresholded ("ignore small") log10 Bayes factors
        t = pl.program_id(1)
        nt = pl.num_programs(1)

        l0 = jnp.log10(x_ref[0] + EPS)   # cephalic
        l1 = jnp.log10(x_ref[1] + EPS)   # transverse
        l2 = jnp.log10(x_ref[2] + EPS)   # breech

        tc = l1 - l0                     # transverse vs cephalic
        bc = l2 - l0                     # breech vs cephalic
        bt = bc - tc                     # breech vs transverse (from unclamped values)

        tc = jnp.clip(tc, -1.0, 1.0)
        bc = jnp.clip(bc, -1.0, 1.0)
        bt = jnp.clip(bt, -1.0, 1.0)

        def ignore_small(v):
            # Threshold(0.1,0)(v) - Threshold(0.1,0)(-v)  ==  v where |v| > 0.1 else 0
            return jnp.where(jnp.abs(v) > 0.1, v, 0.0)

        tci = ignore_small(tc)
        bci = ignore_small(bc)
        bti = ignore_small(bt)

        # Single fused block stores in the PyTorch [B, 3, T] layout.
        lbf_ref[...] = jnp.concatenate(
            [tc[:, None, :], bc[:, None, :], bt[:, None, :]], axis=1)
        lbf_is_ref[...] = jnp.concatenate(
            [tci[:, None, :], bci[:, None, :], bti[:, None, :]], axis=1)

        # Partial time-sum for this T tile: [TB, 3].
        psum = jnp.concatenate(
            [jnp.sum(tci, axis=1, keepdims=True),
             jnp.sum(bci, axis=1, keepdims=True),
             jnp.sum(bti, axis=1, keepdims=True)], axis=1)

        @pl.when(t == 0)
        def _():
            p_ref[...] = jnp.zeros_like(p_ref)

        p_ref[...] += psum

        @pl.when(t == nt - 1)
        def _():
            s = jnp.clip(p_ref[...], -2.0, 2.0)
            odds = jnp.power(10.0, prior + s)
            p_ref[...] = odds / (1.0 + odds)

    return kernel


def _pick_tile(dim, unit, max_tile):
    """Largest multiple of `unit` that divides `dim` and is <= max_tile.
    Falls back to the full dim (a block equal to the array extent is always legal)."""
    if dim <= max_tile:
        return dim
    if dim % unit != 0:
        return dim
    best = None
    t = unit
    while t <= max_tile:
        if dim % t == 0:
            best = t
        t += unit
    return best if best is not None else dim


def bayes_odds_update(x, prior_odds=1.0):
    """x: [B, T, C] (C >= 3) probabilities.

    Returns (updated_p [B,3], log_bayes_factor_t [B,3,T],
             log_bayes_factor_t_ignore_small [B,3,T]) in float32.
    """
    B, T, C = x.shape
    assert C >= 3

    # One channel-major input plane set [3, B, T]: T on the lane axis, single DMA stream.
    x_cm = jnp.moveaxis(x[..., :3].astype(jnp.float32), -1, 0)

    # Tile sizes: TB multiple of 8 (sublane), TT multiple of 128 (lane), capped so the
    # double-buffered working set (~72*TB*TT bytes + sublane padding) fits the default
    # scoped VMEM on all generations (v5e 16 MiB, v6e/v7x 32 MiB).
    tb = _pick_tile(B, 8, 128)
    tt = _pick_tile(T, 128, 512)
    grid = (B // tb, T // tt)

    kernel = _make_kernel(math.log10(float(prior_odds)))

    p, lbf, lbf_is = pl.pallas_call(
        kernel,
        out_shape=(
            jax.ShapeDtypeStruct((B, 3), jnp.float32),      # updated_p
            jax.ShapeDtypeStruct((B, 3, T), jnp.float32),   # log_bayes_factor_t
            jax.ShapeDtypeStruct((B, 3, T), jnp.float32),   # ..._ignore_small
        ),
        grid=grid,
        in_specs=[
            pl.BlockSpec((3, tb, tt), lambda b, t: (0, b, t)),
        ],
        out_specs=(
            pl.BlockSpec((tb, 3), lambda b, t: (b, 0)),         # resident across t
            pl.BlockSpec((tb, 3, tt), lambda b, t: (b, 0, t)),
            pl.BlockSpec((tb, 3, tt), lambda b, t: (b, 0, t)),
        ),
        compiler_params=pltpu.CompilerParams(
            dimension_semantics=("parallel", "arbitrary")),
    )(x_cm)

    return p, lbf, lbf_is


def _reference_forward(x, prior_odds=1.0):
    """Pure-JAX reference mirroring the PyTorch module."""
    eps = 1e-8
    prior = jnp.log10(jnp.float32(prior_odds))
    x = x.astype(jnp.float32)
    tc = jnp.log10(x[:, :, 1] + eps) - jnp.log10(x[:, :, 0] + eps)
    bc = jnp.log10(x[:, :, 2] + eps) - jnp.log10(x[:, :, 0] + eps)
    bt = bc - tc
    tc = jnp.clip(tc, -1.0, 1.0)
    bc = jnp.clip(bc, -1.0, 1.0)
    bt = jnp.clip(bt, -1.0, 1.0)
    ig = lambda v: jnp.where(jnp.abs(v) > 0.1, v, 0.0)
    tci, bci, bti = ig(tc), ig(bc), ig(bt)

    def post(v):
        odds = 10.0 ** (prior + jnp.clip(v.sum(1), -2.0, 2.0))
        return odds / (1.0 + odds)

    p = jnp.stack([post(tci), post(bci), post(bti)], axis=1)
    lbf = jnp.stack([tc, bc, bt], axis=1)
    lbf_is = jnp.stack([tci, bci, bti], axis=1)
    return p, lbf, lbf_is


def _check(outs, refs):
    for got, want in zip(outs, refs):
        np.testing.assert_allclose(np.asarray(got), np.asarray(want),
                                   rtol=1e-4, atol=1e-5)


if __name__ == "__main__":
    # Small shape consistent with the module: batch=2, time-steps=8, classes=4.
    key = jax.random.PRNGKey(0)
    B, T, C = 2, 8, 4
    logits = jax.random.normal(key, (B, T, C), dtype=jnp.float32)
    x = jax.nn.softmax(logits, axis=-1)  # probabilities, like a classifier head

    outs = bayes_odds_update(x, prior_odds=1.0)
    jax.block_until_ready(outs)
    _check(outs, _reference_forward(x, prior_odds=1.0))

    # Larger shape that exercises the (B, T) tiling and cross-tile time accumulation.
    B2, T2, C2 = 16, 1024, 4
    logits2 = jax.random.normal(jax.random.PRNGKey(1), (B2, T2, C2), dtype=jnp.float32)
    x2 = jax.nn.softmax(logits2, axis=-1)

    outs2 = bayes_odds_update(x2, prior_odds=1.0)
    jax.block_until_ready(outs2)
    _check(outs2, _reference_forward(x2, prior_odds=1.0))

    print("KERNEL_OK")
</pallas_src>

<mosaic_0001>
module attributes {stable_mosaic.version = 11 : i64} {
  func.func @kernel(%arg0: i32, %arg1: i32, %arg2: memref<3x2x8xf32, #tpu.memory_space<vmem>>, %arg3: memref<2x3xf32, #tpu.memory_space<vmem>>, %arg4: memref<2x3x8xf32, #tpu.memory_space<vmem>>, %arg5: memref<2x3x8xf32, #tpu.memory_space<vmem>>) attributes {dimension_semantics = [#tpu.dimension_semantics<parallel>, #tpu.dimension_semantics<arbitrary>], iteration_bounds = array<i64: 1, 1>, scalar_prefetch = 0 : i64, scratch_operands = 0 : i64, tpu.core_type = #tpu.core_type<tc>, window_params = [{transform_indices = @transform_0, window_bounds = array<i64: 3, 2, 8>}, {transform_indices = @transform_1, window_bounds = array<i64: 2, 3>}, {transform_indices = @transform_2, window_bounds = array<i64: 2, 3, 8>}, {transform_indices = @transform_3, window_bounds = array<i64: 2, 3, 8>}]} {
    %c0 = arith.constant 0 : index
    %c0_0 = arith.constant 0 : index
    %c0_1 = arith.constant 0 : index
    %0 = vector.load %arg2[%c0, %c0_0, %c0_1] : memref<3x2x8xf32, #tpu.memory_space<vmem>>, vector<1x2x8xf32>
    %1 = vector.shape_cast %0 : vector<1x2x8xf32> to vector<2x8xf32>
    %cst = arith.constant 9.99999993E-9 : f32
    %2 = vector.broadcast %cst : f32 to vector<2x8xf32>
    %3 = arith.addf %1, %2 : vector<2x8xf32>
    %4 = math.log %3 : vector<2x8xf32>
    %cst_2 = arith.constant 0.434294492 : f32
    %5 = vector.broadcast %cst_2 : f32 to vector<2x8xf32>
    %6 = arith.mulf %4, %5 : vector<2x8xf32>
    %c1 = arith.constant 1 : index
    %c0_3 = arith.constant 0 : index
    %c0_4 = arith.constant 0 : index
    %7 = vector.load %arg2[%c1, %c0_3, %c0_4] : memref<3x2x8xf32, #tpu.memory_space<vmem>>, vector<1x2x8xf32>
    %8 = vector.shape_cast %7 : vector<1x2x8xf32> to vector<2x8xf32>
    %cst_5 = arith.constant 9.99999993E-9 : f32
    %9 = vector.broadcast %cst_5 : f32 to vector<2x8xf32>
    %10 = arith.addf %8, %9 : vector<2x8xf32>
    %11 = math.log %10 : vector<2x8xf32>
    %cst_6 = arith.constant 0.434294492 : f32
    %12 = vector.broadcast %cst_6 : f32 to vector<2x8xf32>
    %13 = arith.mulf %11, %12 : vector<2x8xf32>
    %c2 = arith.constant 2 : index
    %c0_7 = arith.constant 0 : index
    %c0_8 = arith.constant 0 : index
    %14 = vector.load %arg2[%c2, %c0_7, %c0_8] : memref<3x2x8xf32, #tpu.memory_space<vmem>>, vector<1x2x8xf32>
    %15 = vector.shape_cast %14 : vector<1x2x8xf32> to vector<2x8xf32>
    %cst_9 = arith.constant 9.99999993E-9 : f32
    %16 = vector.broadcast %cst_9 : f32 to vector<2x8xf32>
    %17 = arith.addf %15, %16 : vector<2x8xf32>
    %18 = math.log %17 : vector<2x8xf32>
    %cst_10 = arith.constant 0.434294492 : f32
    %19 = vector.broadcast %cst_10 : f32 to vector<2x8xf32>
    %20 = arith.mulf %18, %19 : vector<2x8xf32>
    %21 = arith.subf %13, %6 : vector<2x8xf32>
    %22 = arith.subf %20, %6 : vector<2x8xf32>
    %23 = arith.subf %22, %21 : vector<2x8xf32>
    %cst_11 = arith.constant -1.000000e+00 : f32
    %cst_12 = arith.constant 1.000000e+00 : f32
    %24 = vector.broadcast %cst_11 : f32 to vector<2x8xf32>
    %25 = arith.maximumf %24, %21 : vector<2x8xf32>
    %26 = vector.broadcast %cst_12 : f32 to vector<2x8xf32>
    %27 = arith.minimumf %26, %25 : vector<2x8xf32>
    %cst_13 = arith.constant -1.000000e+00 : f32
    %cst_14 = arith.constant 1.000000e+00 : f32
    %28 = vector.broadcast %cst_13 : f32 to vector<2x8xf32>
    %29 = arith.maximumf %28, %22 : vector<2x8xf32>
    %30 = vector.broadcast %cst_14 : f32 to vector<2x8xf32>
    %31 = arith.minimumf %30, %29 : vector<2x8xf32>
    %cst_15 = arith.constant -1.000000e+00 : f32
    %cst_16 = arith.constant 1.000000e+00 : f32
    %32 = vector.broadcast %cst_15 : f32 to vector<2x8xf32>
    %33 = arith.maximumf %32, %23 : vector<2x8xf32>
    %34 = vector.broadcast %cst_16 : f32 to vector<2x8xf32>
    %35 = arith.minimumf %34, %33 : vector<2x8xf32>
    %36 = math.absf %27 : vector<2x8xf32>
    %cst_17 = arith.constant 1.000000e-01 : f32
    %37 = vector.broadcast %cst_17 : f32 to vector<2x8xf32>
    %38 = arith.cmpf ogt, %36, %37 : vector<2x8xf32>
    %cst_18 = arith.constant 0.000000e+00 : f32
    %39 = vector.broadcast %cst_18 : f32 to vector<2x8xf32>
    %40 = arith.select %38, %27, %39 : vector<2x8xi1>, vector<2x8xf32>
    %41 = math.absf %31 : vector<2x8xf32>
    %cst_19 = arith.constant 1.000000e-01 : f32
    %42 = vector.broadcast %cst_19 : f32 to vector<2x8xf32>
    %43 = arith.cmpf ogt, %41, %42 : vector<2x8xf32>
    %cst_20 = arith.constant 0.000000e+00 : f32
    %44 = vector.broadcast %cst_20 : f32 to vector<2x8xf32>
    %45 = arith.select %43, %31, %44 : vector<2x8xi1>, vector<2x8xf32>
    %46 = math.absf %35 : vector<2x8xf32>
    %cst_21 = arith.constant 1.000000e-01 : f32
    %47 = vector.broadcast %cst_21 : f32 to vector<2x8xf32>
    %48 = arith.cmpf ogt, %46, %47 : vector<2x8xf32>
    %cst_22 = arith.constant 0.000000e+00 : f32
    %49 = vector.broadcast %cst_22 : f32 to vector<2x8xf32>
    %50 = arith.select %48, %35, %49 : vector<2x8xi1>, vector<2x8xf32>
    %51 = vector.shape_cast %27 : vector<2x8xf32> to vector<2x1x8xf32>
    %52 = vector.shape_cast %31 : vector<2x8xf32> to vector<2x1x8xf32>
    %53 = vector.shape_cast %35 : vector<2x8xf32> to vector<2x1x8xf32>
    %54 = tpu.concatenate %51, %52, %53 in 1 : vector<2x1x8xf32>, vector<2x1x8xf32>, vector<2x1x8xf32> -> vector<2x3x8xf32>
    %c0_23 = arith.constant 0 : index
    %c0_24 = arith.constant 0 : index
    %c0_25 = arith.constant 0 : index
    %55 = vector.load %arg4[%c0_23, %c0_24, %c0_25] : memref<2x3x8xf32, #tpu.memory_space<vmem>>, vector<2x3x8xf32>
    tpu.vector_store %arg4[%c0_23, %c0_24, %c0_25], %54 {strides = array<i32>} : memref<2x3x8xf32, #tpu.memory_space<vmem>>, vector<2x3x8xf32>,
    %56 = vector.shape_cast %40 : vector<2x8xf32> to vector<2x1x8xf32>
    %57 = vector.shape_cast %45 : vector<2x8xf32> to vector<2x1x8xf32>
    %58 = vector.shape_cast %50 : vector<2x8xf32> to vector<2x1x8xf32>
    %59 = tpu.concatenate %56, %57, %58 in 1 : vector<2x1x8xf32>, vector<2x1x8xf32>, vector<2x1x8xf32> -> vector<2x3x8xf32>
    %c0_26 = arith.constant 0 : index
    %c0_27 = arith.constant 0 : index
    %c0_28 = arith.constant 0 : index
    %60 = vector.load %arg5[%c0_26, %c0_27, %c0_28] : memref<2x3x8xf32, #tpu.memory_space<vmem>>, vector<2x3x8xf32>
    tpu.vector_store %arg5[%c0_26, %c0_27, %c0_28], %59 {strides = array<i32>} : memref<2x3x8xf32, #tpu.memory_space<vmem>>, vector<2x3x8xf32>,
    %cst_29 = arith.constant dense<0.000000e+00> : vector<2xf32>
    %61 = vector.multi_reduction <add>, %40, %cst_29 [1] : vector<2x8xf32> to vector<2xf32>
    %62 = vector.shape_cast %61 : vector<2xf32> to vector<2x1xf32>
    %cst_30 = arith.constant dense<0.000000e+00> : vector<2xf32>
    %63 = vector.multi_reduction <add>, %45, %cst_30 [1] : vector<2x8xf32> to vector<2xf32>
    %64 = vector.shape_cast %63 : vector<2xf32> to vector<2x1xf32>
    %cst_31 = arith.constant dense<0.000000e+00> : vector<2xf32>
    %65 = vector.multi_reduction <add>, %50, %cst_31 [1] : vector<2x8xf32> to vector<2xf32>
    %66 = vector.shape_cast %65 : vector<2xf32> to vector<2x1xf32>
    %67 = tpu.concatenate %62, %64, %66 in 1 : vector<2x1xf32>, vector<2x1xf32>, vector<2x1xf32> -> vector<2x3xf32>
    %c0_i32 = arith.constant 0 : i32
    %68 = arith.cmpi eq, %arg1, %c0_i32 : i32
    %69 = arith.extui %68 : i1 to i32
    %c0_i32_32 = arith.constant 0 : i32
    %70 = arith.cmpi ne, %69, %c0_i32_32 : i32
    scf.if %70 {
      %cst_39 = arith.constant 0.000000e+00 : f32
      %77 = vector.broadcast %cst_39 : f32 to vector<2x3xf32>
      %c0_40 = arith.constant 0 : index
      %c0_41 = arith.constant 0 : index
      %78 = vector.load %arg3[%c0_40, %c0_41] : memref<2x3xf32, #tpu.memory_space<vmem>>, vector<2x3xf32>
      tpu.vector_store %arg3[%c0_40, %c0_41], %77 {strides = array<i32>} : memref<2x3xf32, #tpu.memory_space<vmem>>, vector<2x3xf32>,
    } else {
    }
    %c0_33 = arith.constant 0 : index
    %c0_34 = arith.constant 0 : index
    %71 = vector.load %arg3[%c0_33, %c0_34] : memref<2x3xf32, #tpu.memory_space<vmem>>, vector<2x3xf32>
    %72 = arith.addf %71, %67 : vector<2x3xf32>
    %c0_35 = arith.constant 0 : index
    %c0_36 = arith.constant 0 : index
    %73 = vector.load %arg3[%c0_35, %c0_36] : memref<2x3xf32, #tpu.memory_space<vmem>>, vector<2x3xf32>
    tpu.vector_store %arg3[%c0_35, %c0_36], %72 {strides = array<i32>} : memref<2x3xf32, #tpu.memory_space<vmem>>, vector<2x3xf32>,
    %c0_i32_37 = arith.constant 0 : i32
    %74 = arith.cmpi eq, %arg1, %c0_i32_37 : i32
    %75 = arith.extui %74 : i1 to i32
    %c0_i32_38 = arith.constant 0 : i32
    %76 = arith.cmpi ne, %75, %c0_i32_38 : i32
    scf.if %76 {
      %c0_39 = arith.constant 0 : index
      %c0_40 = arith.constant 0 : index
      %77 = vector.load %arg3[%c0_39, %c0_40] : memref<2x3xf32, #tpu.memory_space<vmem>>, vector<2x3xf32>
      %cst_41 = arith.constant -2.000000e+00 : f32
      %cst_42 = arith.constant 2.000000e+00 : f32
      %78 = vector.broadcast %cst_41 : f32 to vector<2x3xf32>
      %79 = arith.maximumf %78, %77 : vector<2x3xf32>
      %80 = vector.broadcast %cst_42 : f32 to vector<2x3xf32>
      %81 = arith.minimumf %80, %79 : vector<2x3xf32>
      %cst_43 = arith.constant 0.000000e+00 : f32
      %82 = vector.broadcast %cst_43 : f32 to vector<2x3xf32>
      %83 = arith.addf %82, %81 : vector<2x3xf32>
      %cst_44 = arith.constant 1.000000e+01 : f32
      %84 = vector.broadcast %cst_44 : f32 to vector<2x3xf32>
      %85 = math.powf %84, %83 : vector<2x3xf32>
      %cst_45 = arith.constant 1.000000e+00 : f32
      %86 = vector.broadcast %cst_45 : f32 to vector<2x3xf32>
      %87 = arith.addf %86, %85 : vector<2x3xf32>
      %88 = arith.divf %85, %87 : vector<2x3xf32>
      %c0_46 = arith.constant 0 : index
      %c0_47 = arith.constant 0 : index
      %89 = vector.load %arg3[%c0_46, %c0_47] : memref<2x3xf32, #tpu.memory_space<vmem>>, vector<2x3xf32>
      tpu.vector_store %arg3[%c0_46, %c0_47], %88 {strides = array<i32>} : memref<2x3xf32, #tpu.memory_space<vmem>>, vector<2x3xf32>,
    } else {
    }
    return
  }
  func.func @transform_0(%arg0: i32, %arg1: i32) -> (i32, i32, i32) {
    %c0_i32 = arith.constant 0 : i32
    %c0_i32_0 = arith.constant 0 : i32
    return %c0_i32, %arg0, %arg1 : i32, i32, i32
  }
  func.func @transform_1(%arg0: i32, %arg1: i32) -> (i32, i32) {
    %c0_i32 = arith.constant 0 : i32
    %c0_i32_0 = arith.constant 0 : i32
    return %arg0, %c0_i32 : i32, i32
  }
  func.func @transform_2(%arg0: i32, %arg1: i32) -> (i32, i32, i32) {
    %c0_i32 = arith.constant 0 : i32
    %c0_i32_0 = arith.constant 0 : i32
    return %arg0, %c0_i32, %arg1 : i32, i32, i32
  }
  func.func @transform_3(%arg0: i32, %arg1: i32) -> (i32, i32, i32) {
    %c0_i32 = arith.constant 0 : i32
    %c0_i32_0 = arith.constant 0 : i32
    return %arg0, %c0_i32, %arg1 : i32, i32, i32
  }
}

</mosaic_0001>

<llo_original>
// kernel: tpu_custom_call.1
$region0: #{tpu_custom_call.1}
  #allocation0 [shape = 'u32[]', space=smem, size = 0x4, offset = 0x4, fixed_abs, tag = 'smem constant byte address 0x4 - core index']
  #allocation1 [shape = 'u32[72,128]{1,0:T(1,128)}', space=vmem, size = 0x9000, scoped, tag = 'internal scratch']
  %s0 = inlined_call_operand.hbm [shape: f32[3,2,8], index: 0, kind: input, shape index: {}]
  %s1 = inlined_call_operand.hbm [shape: f32[2,3], index: 1, kind: output, shape index: {0}]
  %s2 = inlined_call_operand.vmem [shape: f32[2,3,8], index: 2, kind: output, shape index: {1}]
  %s3 = inlined_call_operand.vmem [shape: f32[2,3,8], index: 3, kind: output, shape index: {2}]
  %4 = xla_tuple %s1, %s2, %s3
  %s5 = sld [smem:[#allocation0]]
  $region42: #{tpu_custom_call.1} parent=0
    _
  %s7 = ssub.s32 1, %s5
  %s8 = scalar_select 0, %s7, %s5
  $region1: #{tpu_custom_call.1} parent=0
    #allocation2 [shape = 'u8[3072]{0}', space=vmem, size = 0xc00, scoped, tag = 'input window, operand 0, single buffered']
    #allocation3 [shape = 's32[1]{0}', space=sflag, size = 0x4, scoped, tag = 'scoped memory for tpu_custom_call.1']
    #allocation4 [shape = 's32[1]{0}', space=sflag, size = 0x4, scoped, tag = 'scoped memory for tpu_custom_call.1']
    #allocation5 [shape = 'u8[1024]{0}', space=vmem, size = 0x400, scoped, tag = 'output window, operand 0, single buffered']
    %9 = vsyncpa [#allocation3], 0
    %10 = vsyncpa [#allocation4], 0
    // Predicated region
    $region2: #{tpu_custom_call.1} parent=1 // pred_check
      _
    $region3: #{tpu_custom_call.1} parent=1 // pred_check_branch
      %12 = sbr.rel (0) target = $region5
    $region4: #{tpu_custom_call.1} parent=1 // pred_region
      %14 = vsyncadd [#allocation3], 0
      %s15 = sshll.u32 %s0, 4
      %s16 = int_to_ptr.hbm [resolvable:$true] %s15
      %s17 = sshll.u32 [#allocation2], 4
      %s18 = int_to_ptr.vmem [resolvable:$true] %s17
      %23 = dma.hbm_to_vmem [thread:$0]  %s16, 96, %s18, [#allocation3], 32, 32, 2
    $region5: #{tpu_custom_call.1} parent=1 // pred_fallthru
      _
    // Predicated region
    $region6: #{tpu_custom_call.1} parent=1 // pred_check
      _
    $region7: #{tpu_custom_call.1} parent=1 // pred_check_branch
      %25 = sbr.rel (0) target = $region9
    $region8: #{tpu_custom_call.1} parent=1 // pred_region
      %27 = dma.done [#allocation3], 96
    $region9: #{tpu_custom_call.1} parent=1 // pred_fallthru
      _
    %v28 = vld [vmem:[#allocation2] sm:$0x3]
    %v29 = vadd.f32 %v28, 1e-08
    %v30 = vlog2.pop %v29
    %v31 = vmul.f32 %v30, 0.6931472
    %v32 = vmul.f32 %v31, 0.4342945
    %s33 = scalar_lea.vmem [#allocation2], 2
    %v34 = vld [vmem:[%s33] sm:$0x3]
    %v35 = vadd.f32 %v34, 1e-08
    %v36 = vlog2.pop %v35
    %v37 = vmul.f32 %v36, 0.6931472
    %v38 = vmul.f32 %v37, 0.4342945
    %s39 = scalar_lea.vmem [#allocation2], 4
    %v40 = vld [vmem:[%s39] sm:$0x3]
    %v41 = vadd.f32 %v40, 1e-08
    %v42 = vlog2.pop %v41
    %v43 = vmul.f32 %v42, 0.6931472
    %v44 = vmul.f32 %v43, 0.4342945
    %v45 = vsub.f32 %v38, %v32
    %v46 = vsub.f32 %v44, %v32
    %v47 = vsub.f32 %v46, %v45
    %v48 = vmax.f32 %v45, -1.0
    %v49 = vmin.f32 %v48, 1.0
    %v50 = vmax.f32 %v46, -1.0
    %v51 = vmin.f32 %v50, 1.0
    %v52 = vmax.f32 %v47, -1.0
    %v53 = vmin.f32 %v52, 1.0
    %v54 = vand.u32 2147483647, %v49
    %vm55 = vcmp.gt.f32.partialorder %v54, 0.1
    %v56 = vsel %vm55, %v49, 0.0
    %v57 = vand.u32 2147483647, %v51
    %vm58 = vcmp.gt.f32.partialorder %v57, 0.1
    %v59 = vsel %vm58, %v51, 0.0
    %v60 = vand.u32 2147483647, %v53
    %vm61 = vcmp.gt.f32.partialorder %v60, 0.1
    %v62 = vsel %vm61, %v53, 0.0
    %v64 = vrot.slane %v49, 1
    %v67 = vrot.slane %v51, 1
    %v69 = vrot.slane %v53, 1
    %v70 = vperm.slane %v51, 0
    %v71 = vperm.slane %v67, 0
    %v74 = vperm.slane %v53, 0
    %v75 = vperm.slane %v69, 0
    %vm78 = vcmask 1040384
    %v79 = vsel %vm78, %v49, %v70
    %v80 = vsel %vm78, %v64, %v71
    %vm81 = vcmask 1041408
    %v82 = vsel %vm81, %v79, %v74
    %v83 = vsel %vm81, %v80, %v75
    %vm84 = vcmask 59392
    %85 = vst.msk [vmem:[%s2] sm:$0x7] %vm84, %v82
    %86 = vst.msk [vmem:[%s2 + $0x4] sm:$0x7] %vm84, %v83
    %v88 = vrot.slane %v56, 1
    %v91 = vrot.slane %v59, 1
    %v93 = vrot.slane %v62, 1
    %v94 = vperm.slane %v59, 0
    %v95 = vperm.slane %v91, 0
    %v98 = vperm.slane %v62, 0
    %v99 = vperm.slane %v93, 0
    %v102 = vsel %vm78, %v56, %v94
    %v103 = vsel %vm78, %v88, %v95
    %v104 = vsel %vm81, %v102, %v98
    %v105 = vsel %vm81, %v103, %v99
    %106 = vst.msk [vmem:[%s3] sm:$0x7] %vm84, %v104
    %107 = vst.msk [vmem:[%s3 + $0x4] sm:$0x7] %vm84, %v105
    %vm108 = vcmask 58368
    %v109 = vsel %vm108, %v56, 0.0
    %110 = vadd.xlane.f32.xlu0 %v109
    %v111 = vpop.xlane.xlu0 %110
    %v112 = vsel %vm108, %v59, 0.0
    %113 = vadd.xlane.f32.xlu0 %v112
    %v114 = vpop.xlane.xlu0 %113
    %v115 = vsel %vm108, %v62, 0.0
    %116 = vadd.xlane.f32.xlu0 %v115
    %v117 = vpop.xlane.xlu0 %116
    %vm118 = vcmask 7168
    %v119 = vsel %vm118, %v111, %v114
    %vm120 = vcmask 15360
    %v121 = vsel %vm120, %v119, %v117
    %p122 = scmp.eq.s32.totalorder 0, 0
    // Predicated region
    $region10: #{tpu_custom_call.1} parent=1 // pred_check
      %p123 = pneg %p122
    $region11: #{tpu_custom_call.1} parent=1 // pred_check_branch
      %125 = sbr.rel (%p123) target = $region13
    $region12: #{tpu_custom_call.1} parent=1 // pred_region
      %vm126 = vcmask 17408
      %127 = vst.msk [vmem:[#allocation5] sm:$0x3] %vm126, 0.0
    $region13: #{tpu_custom_call.1} parent=1 // pred_fallthru
      _
    %v128 = vld [vmem:[#allocation5] sm:$0x3]
    %v129 = vadd.f32 %v128, %v121
    %vm130 = vcmask 17408
    %131 = vst.msk [vmem:[#allocation5] sm:$0x3] %vm130, %v129
    // Predicated region
    $region14: #{tpu_custom_call.1} parent=1 // pred_check
      %p132 = pneg %p122
    $region15: #{tpu_custom_call.1} parent=1 // pred_check_branch
      %134 = sbr.rel (%p132) target = $region17
    $region16: #{tpu_custom_call.1} parent=1 // pred_region
      %v135 = vld [vmem:[#allocation5] sm:$0x3]
      %v136 = vmax.f32 %v135, -2.0
      %v137 = vmin.f32 %v136, 2.0
      %v138 = vadd.f32 %v137, 0.0
      %v139 = vpow.f32 10.0, %v138
      %v140 = vadd.f32 %v139, 1.0
      %v141 = vrcp.pop %v140
      %v142 = vmul.f32 %v140, %v141
      %v143 = vsub.f32 1.0, %v142
      %v144 = vmul.f32 %v141, %v143
      %v145 = vadd.f32 %v141, %v144
      %vm146 = vweird.f32 %v140
      %vm147 = vweird.f32 %v141
      %vm148 = vmor %vm146, %vm147
      %v149 = vsel %vm148, %v141, %v145
      %v150 = vand.u32 2147483647, %v140
      %vm151 = vcmp.eq.f32.partialorder %v150, 8.507059e+37
      %v152 = vand.u32 %v140, 2147483648
      %v153 = vor.u32 1.1754944e-38, %v152
      %v154 = vsel %vm151, %v153, %v149
      %v155 = vmul.f32 %v139, %v154
      %156 = vst.msk [vmem:[#allocation5] sm:$0x3] %vm130, %v155
    $region17: #{tpu_custom_call.1} parent=1 // pred_fallthru
      _
    // Predicated region
    $region18: #{tpu_custom_call.1} parent=1 // pred_check
      _
    $region19: #{tpu_custom_call.1} parent=1 // pred_check_branch
      %158 = sbr.rel (0) target = $region21
    $region20: #{tpu_custom_call.1} parent=1 // pred_region
      %160 = vsyncadd [#allocation4], 0
      %s162 = sshll.u32 [#allocation5], 4
      %s163 = int_to_ptr.vmem [resolvable:$true] %s162
      %s164 = sshll.u32 %s1, 4
      %s165 = int_to_ptr.hbm [resolvable:$true] %s164
      %167 = dma.vmem_to_hbm [thread:$0]  %s163, 32, %s165, [#allocation4]
    $region21: #{tpu_custom_call.1} parent=1 // pred_fallthru
      _
    // Predicated region
    $region22: #{tpu_custom_call.1} parent=1 // pred_check
      _
    $region23: #{tpu_custom_call.1} parent=1 // pred_check_branch
      %169 = sbr.rel (0) target = $region25
    $region24: #{tpu_custom_call.1} parent=1 // pred_region
      _
    $region25: #{tpu_custom_call.1} parent=1 // pred_fallthru
      _
    // Predicated region
    $region26: #{tpu_custom_call.1} parent=1 // pred_check
      _
    $region27: #{tpu_custom_call.1} parent=1 // pred_check_branch
      %171 = sbr.rel (0) target = $region29
    $region28: #{tpu_custom_call.1} parent=1 // pred_region
      _
    $region29: #{tpu_custom_call.1} parent=1 // pred_fallthru
      _
    // Predicated region
    $region30: #{tpu_custom_call.1} parent=1 // pred_check
      _
    $region31: #{tpu_custom_call.1} parent=1 // pred_check_branch
      %173 = sbr.rel (0) target = $region33
    $region32: #{tpu_custom_call.1} parent=1 // pred_region
      %175 = dma.done [#allocation4], 32
    $region33: #{tpu_custom_call.1} parent=1 // pred_fallthru
      _
    // Predicated region
    $region34: #{tpu_custom_call.1} parent=1 // pred_check
      _
    $region35: #{tpu_custom_call.1} parent=1 // pred_check_branch
      %177 = sbr.rel (0) target = $region37
    $region36: #{tpu_custom_call.1} parent=1 // pred_region
      _
    $region37: #{tpu_custom_call.1} parent=1 // pred_fallthru
      _
    // Predicated region
    $region38: #{tpu_custom_call.1} parent=1 // pred_check
      _
    $region39: #{tpu_custom_call.1} parent=1 // pred_check_branch
      %179 = sbr.rel (0) target = $region41
    $region40: #{tpu_custom_call.1} parent=1 // pred_region
      _
    $region41: #{tpu_custom_call.1} parent=1 // pred_fallthru
      _
    %180 = vsyncpa [#allocation3], 1
    %181 = vsyncpa [#allocation4], 1

</llo_original>
